<compile_context>
chip_gen: v5e
topology: v5e:2x2
jax: 0.10.0
libtpu: 0.0.40
codegen_flags: <defaults>
</compile_context>

<pallas_src>
import math

import jax
import jax.numpy as jnp
from jax.experimental import pallas as pl
from jax.experimental.pallas import tpu as pltpu

_MAX_LANE_WIDTH = 16384  # cap the lcm-widened row at 64 KiB of f32 per row


def _layer_scale_kernel(x_ref, g_ref, o_ref):
    # x_ref: (tm, tn) activation tile; g_ref: (1, tn) resident gamma row; o_ref: (tm, tn).
    o_ref[...] = (x_ref[...] * g_ref[...]).astype(o_ref.dtype)


def _vmem_budget():
    """(target_tile_bytes_per_buffer, vmem_limit_bytes), chosen per TPU generation."""
    try:
        info = pltpu.get_tpu_info()
        vmem = int(getattr(info, "vmem_capacity_bytes", 0) or 0)
    except Exception:
        vmem = 0
    if vmem >= (96 << 20):
        # v5e / v6e: 128 MiB physical VMEM -> 8 MiB tiles with a generous scoped limit.
        return 8 << 20, 64 << 20
    # v7x (64 MiB per TC) or unknown: 8 MiB tiles keep the ~33 MiB double-buffered
    # in+out footprint comfortably under the physical VMEM; cap the scoped limit below it.
    return 8 << 20, 48 << 20


def _choose_lane_width(D: int, total: int) -> int:
    """Widest last dim that is a multiple of 128 lanes (unmasked, fully lane-utilized
    stores) and still tiles the flattened activation exactly.  Falls back to D itself
    (full-extent last dim is always layout-legal, but masked when D % 128 != 0)."""
    L = math.lcm(D, 128)
    if total % L == 0 and L <= max(D, _MAX_LANE_WIDTH):
        return L
    return D


def _choose_tiles(R: int, L: int, itemsize: int, target_bytes: int):
    """Pick (tm, tn): ~target_bytes per input buffer, sublane-aligned row counts
    (8/16/32 rows for 32/16/8-bit dtypes) and 128-aligned column splits when needed."""
    row_align = max(8, 32 // max(itemsize, 1))
    row_bytes = L * itemsize
    tm = (target_bytes // max(row_bytes, 1)) // row_align * row_align
    if tm >= row_align:
        return min(tm, R), L
    if L % 128 == 0:
        # Row wider than the budget: add a 128-aligned column split so the
        # double-buffered footprint stays bounded on every generation (v7x: 64 MiB).
        tm = min(row_align, R)
        tn = max(128, (target_bytes // max(tm * itemsize, 1)) // 128 * 128)
        return tm, min(tn, L)
    # TODO(synk): degenerate case (huge last dim that is not 128-aligned and not
    # lcm-tileable) keeps whole rows with a minimal row count; may exceed target_bytes.
    return min(row_align, R), L


def _layer_scale_2d(x2d, g_row, tm, tn, vmem_limit, donate):
    R, L = x2d.shape
    out_dtype = jnp.promote_types(x2d.dtype, g_row.dtype)
    aliases = {0: 0} if (donate and out_dtype == x2d.dtype) else {}
    return pl.pallas_call(
        _layer_scale_kernel,
        out_shape=jax.ShapeDtypeStruct((R, L), out_dtype),
        grid_spec=pltpu.PrefetchScalarGridSpec(
            num_scalar_prefetch=0,
            grid=(pl.cdiv(R, tm), pl.cdiv(L, tn)),
            in_specs=[
                pl.BlockSpec((tm, tn), lambda i, j: (i, j)),
                pl.BlockSpec((1, tn), lambda i, j: (0, j)),  # resident along the row axis
            ],
            out_specs=pl.BlockSpec((tm, tn), lambda i, j: (i, j)),
        ),
        compiler_params=pltpu.CompilerParams(
            # Both axes are independent streaming work.
            # TODO(synk): if a v7x profile shows only one TensorCore active, switch the
            # row axis to pltpu.CORE_PARALLEL (or pl.core_map) to split rows across TCs.
            dimension_semantics=("parallel", "parallel"),
            vmem_limit_bytes=vmem_limit,
        ),
        input_output_aliases=aliases,
    )(x2d, g_row)


def layer_scale(x: jax.Array, gamma: jax.Array, *, donate_x: bool = False,
                _tile_bytes_override: int | None = None) -> jax.Array:
    """x: (..., D), gamma: (D,). Returns x * gamma broadcast over the trailing dim.

    Output dtype matches torch promotion: promote(x.dtype, gamma.dtype).
    Set donate_x=True when x can be consumed (inplace-style buffer reuse).
    """
    orig_shape = x.shape
    D = orig_shape[-1]
    assert gamma.shape == (D,), f"gamma must have shape ({D},), got {gamma.shape}"
    total = x.size
    if total == 0:
        return x * gamma  # degenerate; nothing to stream

    L = _choose_lane_width(D, total)
    x2d = x.reshape(-1, L)
    g_row = gamma.reshape(1, D) if L == D else jnp.tile(gamma, L // D).reshape(1, L)

    itemsize = jnp.dtype(x.dtype).itemsize
    target_bytes, vmem_limit = _vmem_budget()
    if _tile_bytes_override is not None:
        target_bytes = int(_tile_bytes_override)
    tm, tn = _choose_tiles(x2d.shape[0], L, itemsize, target_bytes)

    out2d = _layer_scale_2d(x2d, g_row, tm, tn, vmem_limit, donate_x)
    return out2d.reshape(orig_shape)

# TODO(synk): best case remains fusing LayerScale as an epilogue of the producing
# matmul/attention kernel (removes an entire HBM read+write pass); standalone by spec.


if __name__ == "__main__":
    key = jax.random.PRNGKey(0)
    init_values = 1e-5

    # Module config (matches nn.Parameter(init_values * torch.ones(dim))).
    dim = 32
    gamma = init_values * jnp.ones((dim,), dtype=jnp.float32)

    # 1) Lane-dense path (L = lcm(32,128) = 128): (batch=2, tokens=8, dim=32).
    x = jax.random.normal(key, (2, 8, dim), dtype=jnp.float32)
    out = jax.block_until_ready(layer_scale(x, gamma))
    ref = x * gamma
    assert out.shape == x.shape and out.dtype == ref.dtype
    assert jnp.allclose(out, ref, atol=1e-6, rtol=1e-6)

    # 2) lcm-generalized lane-dense path: D=48 -> L=384 (previously masked fallback).
    dim2 = 48
    gamma2 = init_values * jnp.ones((dim2,), dtype=jnp.float32)
    x2 = jax.random.normal(jax.random.PRNGKey(1), (2, 8, dim2), dtype=jnp.float32)
    out2 = jax.block_until_ready(layer_scale(x2, gamma2))
    assert jnp.allclose(out2, x2 * gamma2, atol=1e-6, rtol=1e-6)

    # 3) Multi-block grid with a ragged tail (R=84 rows, tm=8 -> edge block of 4 rows).
    dim3 = 128
    gamma3 = init_values * jnp.ones((dim3,), dtype=jnp.float32)
    x3 = jax.random.normal(jax.random.PRNGKey(2), (2, 42, dim3), dtype=jnp.float32)
    out3 = jax.block_until_ready(layer_scale(x3, gamma3, _tile_bytes_override=4096))
    assert jnp.allclose(out3, x3 * gamma3, atol=1e-6, rtol=1e-6)

    # 4) Torch-style dtype promotion: bf16 activations with f32 gamma -> f32 output.
    x4 = jax.random.normal(jax.random.PRNGKey(3), (2, 8, dim), dtype=jnp.bfloat16)
    out4 = jax.block_until_ready(layer_scale(x4, gamma))
    assert out4.dtype == jnp.float32
    assert jnp.allclose(out4, x4.astype(jnp.float32) * gamma, atol=1e-6, rtol=1e-6)

    print("KERNEL_OK")
</pallas_src>

<mosaic_0001>
module attributes {stable_mosaic.version = 11 : i64} {
  func.func @_layer_scale_kernel(%arg0: i32, %arg1: i32, %arg2: memref<4x128xf32, #tpu.memory_space<vmem>>, %arg3: memref<1x128xf32, #tpu.memory_space<vmem>>, %arg4: memref<4x128xf32, #tpu.memory_space<vmem>>) attributes {dimension_semantics = [#tpu.dimension_semantics<parallel>, #tpu.dimension_semantics<parallel>], iteration_bounds = array<i64: 1, 1>, scalar_prefetch = 0 : i64, scratch_operands = 0 : i64, tpu.core_type = #tpu.core_type<tc>, window_params = [{transform_indices = @transform_0, window_bounds = array<i64: 4, 128>}, {transform_indices = @transform_1, window_bounds = array<i64: 1, 128>}, {transform_indices = @transform_2, window_bounds = array<i64: 4, 128>}]} {
    %c0 = arith.constant 0 : index
    %c0_0 = arith.constant 0 : index
    %0 = vector.load %arg2[%c0, %c0_0] : memref<4x128xf32, #tpu.memory_space<vmem>>, vector<4x128xf32>
    %c0_1 = arith.constant 0 : index
    %c0_2 = arith.constant 0 : index
    %1 = vector.load %arg3[%c0_1, %c0_2] : memref<1x128xf32, #tpu.memory_space<vmem>>, vector<1x128xf32>
    %2 = vector.broadcast %1 : vector<1x128xf32> to vector<4x128xf32>
    %3 = arith.mulf %0, %2 : vector<4x128xf32>
    %c0_3 = arith.constant 0 : index
    %c0_4 = arith.constant 0 : index
    %4 = vector.load %arg4[%c0_3, %c0_4] : memref<4x128xf32, #tpu.memory_space<vmem>>, vector<4x128xf32>
    tpu.vector_store %arg4[%c0_3, %c0_4], %3 {strides = array<i32>} : memref<4x128xf32, #tpu.memory_space<vmem>>, vector<4x128xf32>,
    return
  }
  func.func @transform_0(%arg0: i32, %arg1: i32) -> (i32, i32) {
    %c0_i32 = arith.constant 0 : i32
    return %arg0, %arg1 : i32, i32
  }
  func.func @transform_1(%arg0: i32, %arg1: i32) -> (i32, i32) {
    %c0_i32 = arith.constant 0 : i32
    %c0_i32_0 = arith.constant 0 : i32
    return %c0_i32, %arg1 : i32, i32
  }
  func.func @transform_2(%arg0: i32, %arg1: i32) -> (i32, i32) {
    %c0_i32 = arith.constant 0 : i32
    return %arg0, %arg1 : i32, i32
  }
}

</mosaic_0001>

<llo_original>
// kernel: tpu_custom_call.1
$region0: #{tpu_custom_call.1}
  #allocation0 [shape = 'u32[]', space=smem, size = 0x4, offset = 0x4, fixed_abs, tag = 'smem constant byte address 0x4 - core index']
  #allocation1 [shape = 'u32[72,128]{1,0:T(1,128)}', space=vmem, size = 0x9000, scoped, tag = 'internal scratch']
  %s0 = inlined_call_operand.hbm [shape: f32[4,128], index: 0, kind: input, shape index: {}]
  %s1 = inlined_call_operand.hbm [shape: f32[1,128], index: 1, kind: input, shape index: {}]
  %s2 = inlined_call_operand.hbm [shape: f32[4,128], index: 2, kind: output, shape index: {}]
  %s3 = sld [smem:[#allocation0]]
  $region26: #{tpu_custom_call.1} parent=0
    _
  %s5 = ssub.s32 1, %s3
  %s6 = scalar_select 0, %s5, %s3
  $region1: #{tpu_custom_call.1} parent=0
    #allocation2 [shape = 'u8[2048]{0}', space=vmem, size = 0x800, scoped, tag = 'input window, operand 0, single buffered']
    #allocation3 [shape = 's32[1]{0}', space=sflag, size = 0x4, scoped, tag = 'scoped memory for tpu_custom_call.1']
    #allocation4 [shape = 's32[1]{0}', space=sflag, size = 0x4, scoped, tag = 'scoped memory for tpu_custom_call.1']
    #allocation5 [shape = 'u8[512]{0}', space=vmem, size = 0x400, scoped, tag = 'input window, operand 1, single buffered']
    #allocation6 [shape = 's32[1]{0}', space=sflag, size = 0x4, scoped, tag = 'scoped memory for tpu_custom_call.1']
    #allocation7 [shape = 'u8[2048]{0}', space=vmem, size = 0x800, scoped, tag = 'output window, operand 0, single buffered']
    %7 = vsyncpa [#allocation3], 0
    %8 = vsyncpa [#allocation6], 0
    %9 = vsyncpa [#allocation4], 0
    // Predicated region
    $region2: #{tpu_custom_call.1} parent=1 // pred_check
      _
    $region3: #{tpu_custom_call.1} parent=1 // pred_check_branch
      %11 = sbr.rel (0) target = $region5
    $region4: #{tpu_custom_call.1} parent=1 // pred_region
      %13 = vsyncadd [#allocation3], 0
      %s15 = sshll.u32 %s0, 4
      %s16 = int_to_ptr.hbm [resolvable:$true] %s15
      %s17 = sshll.u32 [#allocation2], 4
      %s18 = int_to_ptr.vmem [resolvable:$true] %s17
      %20 = dma.hbm_to_vmem [thread:$0]  %s16, 64, %s18, [#allocation3]
    $region5: #{tpu_custom_call.1} parent=1 // pred_fallthru
      _
    // Predicated region
    $region6: #{tpu_custom_call.1} parent=1 // pred_check
      _
    $region7: #{tpu_custom_call.1} parent=1 // pred_check_branch
      %22 = sbr.rel (0) target = $region9
    $region8: #{tpu_custom_call.1} parent=1 // pred_region
      %24 = vsyncadd [#allocation6], 0
      %s26 = sshll.u32 %s1, 4
      %s27 = int_to_ptr.hbm [resolvable:$true] %s26
      %s28 = sshll.u32 [#allocation5], 4
      %s29 = int_to_ptr.vmem [resolvable:$true] %s28
      %31 = dma.hbm_to_vmem [thread:$0]  %s27, 16, %s29, [#allocation6]
    $region9: #{tpu_custom_call.1} parent=1 // pred_fallthru
      _
    // Predicated region
    $region10: #{tpu_custom_call.1} parent=1 // pred_check
      _
    $region11: #{tpu_custom_call.1} parent=1 // pred_check_branch
      %33 = sbr.rel (0) target = $region13
    $region12: #{tpu_custom_call.1} parent=1 // pred_region
      %35 = dma.done [#allocation3], 64
    $region13: #{tpu_custom_call.1} parent=1 // pred_fallthru
      _
    // Predicated region
    $region14: #{tpu_custom_call.1} parent=1 // pred_check
      _
    $region15: #{tpu_custom_call.1} parent=1 // pred_check_branch
      %37 = sbr.rel (0) target = $region17
    $region16: #{tpu_custom_call.1} parent=1 // pred_region
      %39 = dma.done [#allocation6], 16
    $region17: #{tpu_custom_call.1} parent=1 // pred_fallthru
      _
    %v40 = vld [vmem:[#allocation2] sm:$0xf]
    %v41 = vld [vmem:[#allocation5] sm:$0x1]
    %v43 = vperm.slane %v41, 0
    %v45 = vmul.f32 %v40, %v43
    %46 = vst [vmem:[#allocation7] sm:$0xf] %v45
    // Predicated region
    $region18: #{tpu_custom_call.1} parent=1 // pred_check
      _
    $region19: #{tpu_custom_call.1} parent=1 // pred_check_branch
      %48 = sbr.rel (0) target = $region21
    $region20: #{tpu_custom_call.1} parent=1 // pred_region
      %50 = vsyncadd [#allocation4], 0
      %s52 = sshll.u32 [#allocation7], 4
      %s53 = int_to_ptr.vmem [resolvable:$true] %s52
      %s54 = sshll.u32 %s2, 4
      %s55 = int_to_ptr.hbm [resolvable:$true] %s54
      %57 = dma.vmem_to_hbm [thread:$0]  %s53, 64, %s55, [#allocation4]
    $region21: #{tpu_custom_call.1} parent=1 // pred_fallthru
      _
    // Predicated region
    $region22: #{tpu_custom_call.1} parent=1 // pred_check
      _
    $region23: #{tpu_custom_call.1} parent=1 // pred_check_branch
      %59 = sbr.rel (0) target = $region25
    $region24: #{tpu_custom_call.1} parent=1 // pred_region
      %61 = dma.done [#allocation4], 64
    $region25: #{tpu_custom_call.1} parent=1 // pred_fallthru
      _
    %62 = vsyncpa [#allocation3], 1
    %63 = vsyncpa [#allocation6], 1
    %64 = vsyncpa [#allocation4], 1

</llo_original>
